<compile_context>
chip_gen: v6e
topology: v6e:2x2x1
jax: 0.10.0
libtpu: 0.0.40
codegen_flags: <defaults>
</compile_context>

<pallas_src>
import functools

import jax
import jax.numpy as jnp
from jax.experimental import pallas as pl
from jax.experimental.pallas import tpu as pltpu


def _ghmr_partial_kernel(pred_ref, target_ref, lw_ref, out_ref, *,
                         mu, bins, blk_rows, valid_rows, mask_rows):
    """Per-tile partial sums.

    out_ref has shape (2*bins, 128): rows [0, bins) hold per-bin valid-element
    counts (summed over sublanes, per lane), rows [bins, 2*bins) hold the
    per-bin sums of the ASL1 loss.  The cross-lane reduction happens outside.
    """
    pred = pred_ref[...].astype(jnp.float32)
    target = target_ref[...].astype(jnp.float32)
    lw = lw_ref[...].astype(jnp.float32)

    diff = pred - target
    x = diff * diff + (mu * mu)
    r = jax.lax.rsqrt(x)                 # one EUP op instead of sqrt + divide
    loss_elem = x * r - mu               # = sqrt(diff^2 + mu^2) - mu
    g = jnp.abs(diff) * r                # gradient norm, in [0, 1]

    valid = lw > 0.0
    if mask_rows:
        # Last grid block may extend past the (rows8, 128) array; mask those
        # rows so out-of-bounds garbage cannot contribute.
        row0 = pl.program_id(0) * blk_rows
        row_idx = jax.lax.broadcasted_iota(jnp.int32, pred.shape, 0) + row0
        valid = jnp.logical_and(valid, row_idx < valid_rows)

    # One precomputed bin id (floor(g * bins) clamped); invalid elements -> -1.
    bin_id = jnp.minimum(jnp.floor(g * bins), bins - 1.0)
    bin_id = jnp.where(valid, bin_id, -1.0)

    zeros = jnp.zeros_like(loss_elem)

    # Totals over all valid elements (sublane reductions only -> (1, 128)).
    cnt_total = jnp.sum(valid.astype(jnp.float32), axis=0, keepdims=True)
    loss_total = jnp.sum(jnp.where(valid, loss_elem, zeros),
                         axis=0, keepdims=True)

    # bins is static (10) -> fully unrolled.  Bin 0 is derived by subtraction.
    cnt_rows, loss_rows = [], []
    cnt_rest = jnp.zeros_like(cnt_total)
    loss_rest = jnp.zeros_like(loss_total)
    for i in range(1, bins):
        inds = bin_id == float(i)
        cnt_i = jnp.sum(inds.astype(jnp.float32), axis=0, keepdims=True)
        loss_i = jnp.sum(jnp.where(inds, loss_elem, zeros),
                         axis=0, keepdims=True)
        cnt_rows.append(cnt_i)
        loss_rows.append(loss_i)
        cnt_rest = cnt_rest + cnt_i
        loss_rest = loss_rest + loss_i

    cnt0 = cnt_total - cnt_rest
    loss0 = loss_total - loss_rest

    # One full-tile store instead of 2*bins masked single-row stores.
    stacked = jnp.concatenate([cnt0] + cnt_rows + [loss0] + loss_rows, axis=0)
    out_ref[...] = stacked


def _ghmr_reference(pred, target, label_weight, *, mu=0.02, bins=10,
                    loss_weight=1.0):
    """Pure-JAX reference mirroring the PyTorch forward (momentum == 0)."""
    diff = pred - target
    sq = jnp.sqrt(diff * diff + mu * mu)
    loss = sq - mu
    g = jnp.abs(diff / sq)
    valid = label_weight > 0
    tot = jnp.maximum(jnp.sum(label_weight.astype(jnp.float32)), 1.0)
    edges = [i / bins for i in range(bins)] + [1000.0]
    weights = jnp.zeros_like(g)
    n = jnp.zeros((), jnp.float32)
    for i in range(bins):
        inds = (g >= edges[i]) & (g < edges[i + 1]) & valid
        num = jnp.sum(inds.astype(jnp.float32))
        has = num > 0
        weights = jnp.where(
            inds, jnp.where(has, tot / jnp.maximum(num, 1.0), 0.0), weights)
        n = n + jnp.where(has, 1.0, 0.0)
    weights = weights / jnp.where(n > 0, n, 1.0)
    return jnp.sum(loss * weights) / tot * loss_weight


def ghmr_loss(pred, target, label_weight, *, mu=0.02, bins=10, momentum=0.0,
              loss_weight=1.0, block_rows=2048, small_size_threshold=65536):
    """GHM-R loss (momentum == 0 path).  pred/target/label_weight: [N, C]."""
    if momentum and momentum > 0:
        # TODO(synk): momentum > 0 needs a persistent EMA acc_sum buffer
        # across calls (pl.get_global SMEM state); only momentum == 0 is done.
        raise NotImplementedError("GHMR momentum > 0 is not implemented")

    lanes = 128
    bins = int(bins)
    size = int(pred.size)

    # Tiny inputs: kernel launch + padding dominate -> pure-jnp fast path.
    if size < int(small_size_threshold):
        return _ghmr_reference(pred, target, label_weight, mu=mu, bins=bins,
                               loss_weight=loss_weight)

    rows = -(-size // lanes)                   # ceil(size / 128)
    rows8 = ((rows + 7) // 8) * 8              # pad rows to a multiple of 8 only
    pad = rows8 * lanes - size

    def prep(x):
        x = x.reshape(-1)                      # keep native dtype; cast in-kernel
        if pad:
            x = jnp.pad(x, (0, pad))           # label_weight pads to 0 -> invalid
        return x.reshape(rows8, lanes)

    p2 = prep(pred)
    t2 = prep(target)
    w2 = prep(label_weight)

    # Block sizing: multiple of 8, capped by block_rows; split single-tile
    # medium inputs into two tiles so both TensorCores (v7x) get work.
    blk = max(8, (min(int(block_rows), rows8) // 8) * 8)
    num_tiles = -(-rows8 // blk)
    if num_tiles == 1 and rows8 >= 16:
        blk = ((rows8 // 2 + 7) // 8) * 8
        num_tiles = -(-rows8 // blk)
    mask_rows = (num_tiles * blk != rows8)     # ragged last block -> in-kernel mask

    # VMEM budget: double-buffered inputs + ~8 full-block f32 temporaries.
    in_bytes = sum(2 * blk * lanes * a.dtype.itemsize for a in (p2, t2, w2))
    tmp_bytes = 8 * blk * lanes * 4
    vmem_limit = int(min(96 * 1024 * 1024,
                         max(32 * 1024 * 1024, 1.5 * (in_bytes + tmp_bytes))))

    elems = rows8 * lanes
    cost = pl.CostEstimate(
        flops=60 * elems,
        transcendentals=elems,
        bytes_accessed=int(sum(a.size * a.dtype.itemsize for a in (p2, t2, w2))
                           + num_tiles * 2 * bins * lanes * 4),
    )

    kernel = functools.partial(
        _ghmr_partial_kernel, mu=float(mu), bins=bins, blk_rows=blk,
        valid_rows=rows8, mask_rows=mask_rows)

    parts = pl.pallas_call(
        kernel,
        out_shape=jax.ShapeDtypeStruct((num_tiles, 2 * bins, lanes), jnp.float32),
        grid=(num_tiles,),
        in_specs=[
            pl.BlockSpec((blk, lanes), lambda i: (i, 0)),
            pl.BlockSpec((blk, lanes), lambda i: (i, 0)),
            pl.BlockSpec((blk, lanes), lambda i: (i, 0)),
        ],
        out_specs=pl.BlockSpec((None, 2 * bins, lanes), lambda i: (i, 0, 0)),
        compiler_params=pltpu.CompilerParams(
            dimension_semantics=("parallel",),
            vmem_limit_bytes=vmem_limit,
        ),
        cost_estimate=cost,
    )(p2, t2, w2)

    # Finalize (tiny): `tot` cancels -> total = (1/n) * sum_i loss_sum_i / num_i.
    cnt = jnp.sum(parts[:, :bins, :], axis=(0, 2))            # [bins]
    lsum = jnp.sum(parts[:, bins:, :], axis=(0, 2))           # [bins]
    has = cnt > 0.0
    n = jnp.sum(has.astype(jnp.float32))
    per_bin = jnp.where(has, lsum / jnp.maximum(cnt, 1.0), 0.0)
    total = jnp.sum(per_bin) / jnp.maximum(n, 1.0)
    return total * loss_weight


if __name__ == "__main__":
    key = jax.random.PRNGKey(0)
    k1, k2, k3, k4, k5, k6 = jax.random.split(key, 6)

    # [batch_num, 4] box-regression predictions; some samples ignored (weight 0).
    batch_num, channels = 8, 4
    pred = jax.random.normal(k1, (batch_num, channels), dtype=jnp.float32)
    target = jax.random.normal(k2, (batch_num, channels), dtype=jnp.float32)
    label_weight = (
        jax.random.uniform(k3, (batch_num, channels)) > 0.25
    ).astype(jnp.float32)
    ref = _ghmr_reference(pred, target, label_weight)

    # 1) Force the Pallas kernel path on the tiny module-sized input.
    loss_k = jax.block_until_ready(
        ghmr_loss(pred, target, label_weight, small_size_threshold=0))
    assert jnp.allclose(loss_k, ref, rtol=1e-4, atol=1e-6), (loss_k, ref)

    # 2) Default path: tiny input takes the pure-jnp fast path.
    loss_f = jax.block_until_ready(ghmr_loss(pred, target, label_weight))
    assert jnp.allclose(loss_f, ref, rtol=1e-5, atol=1e-7), (loss_f, ref)

    # 3) Multi-tile case exercising the two-core split + ragged-row masking.
    bp = jax.random.normal(k4, (750, channels), dtype=jnp.float32)
    bt = jax.random.normal(k5, (750, channels), dtype=jnp.float32)
    bw = (jax.random.uniform(k6, (750, channels)) > 0.25).astype(jnp.float32)
    loss_b = jax.block_until_ready(
        ghmr_loss(bp, bt, bw, small_size_threshold=0))
    ref_b = _ghmr_reference(bp, bt, bw)
    assert jnp.allclose(loss_b, ref_b, rtol=1e-4, atol=1e-6), (loss_b, ref_b)

    print("KERNEL_OK")
</pallas_src>

<mosaic_0001>
module attributes {stable_mosaic.version = 11 : i64} {
  func.func @_ghmr_partial_kernel(%arg0: i32, %arg1: memref<8x128xf32, #tpu.memory_space<vmem>>, %arg2: memref<8x128xf32, #tpu.memory_space<vmem>>, %arg3: memref<8x128xf32, #tpu.memory_space<vmem>>, %arg4: memref<1x20x128xf32, #tpu.memory_space<vmem>>) attributes {dimension_semantics = [#tpu.dimension_semantics<parallel>], iteration_bounds = array<i64: 1>, scalar_prefetch = 0 : i64, scratch_operands = 0 : i64, tpu.core_type = #tpu.core_type<tc>, window_params = [{transform_indices = @transform_0, window_bounds = array<i64: 8, 128>}, {transform_indices = @transform_1, window_bounds = array<i64: 8, 128>}, {transform_indices = @transform_2, window_bounds = array<i64: 8, 128>}, {transform_indices = @transform_3, window_bounds = array<i64: 1, 20, 128>}]} {
    %c0 = arith.constant 0 : index
    %c0_0 = arith.constant 0 : index
    %0 = vector.load %arg1[%c0, %c0_0] : memref<8x128xf32, #tpu.memory_space<vmem>>, vector<8x128xf32>
    %c0_1 = arith.constant 0 : index
    %c0_2 = arith.constant 0 : index
    %1 = vector.load %arg2[%c0_1, %c0_2] : memref<8x128xf32, #tpu.memory_space<vmem>>, vector<8x128xf32>
    %c0_3 = arith.constant 0 : index
    %c0_4 = arith.constant 0 : index
    %2 = vector.load %arg3[%c0_3, %c0_4] : memref<8x128xf32, #tpu.memory_space<vmem>>, vector<8x128xf32>
    %3 = arith.subf %0, %1 : vector<8x128xf32>
    %4 = arith.mulf %3, %3 : vector<8x128xf32>
    %cst = arith.constant 4.000000e-04 : f32
    %5 = vector.broadcast %cst : f32 to vector<8x128xf32>
    %6 = arith.addf %4, %5 : vector<8x128xf32>
    %7 = math.rsqrt %6 : vector<8x128xf32>
    %8 = arith.mulf %6, %7 : vector<8x128xf32>
    %cst_5 = arith.constant 2.000000e-02 : f32
    %9 = vector.broadcast %cst_5 : f32 to vector<8x128xf32>
    %10 = arith.subf %8, %9 : vector<8x128xf32>
    %11 = math.absf %3 : vector<8x128xf32>
    %12 = arith.mulf %11, %7 : vector<8x128xf32>
    %cst_6 = arith.constant 0.000000e+00 : f32
    %13 = vector.broadcast %cst_6 : f32 to vector<8x128xf32>
    %14 = arith.cmpf ogt, %2, %13 : vector<8x128xf32>
    %cst_7 = arith.constant 1.000000e+01 : f32
    %15 = vector.broadcast %cst_7 : f32 to vector<8x128xf32>
    %16 = arith.mulf %12, %15 : vector<8x128xf32>
    %17 = math.floor %16 : vector<8x128xf32>
    %cst_8 = arith.constant 9.000000e+00 : f32
    %18 = vector.broadcast %cst_8 : f32 to vector<8x128xf32>
    %19 = arith.minimumf %17, %18 : vector<8x128xf32>
    %cst_9 = arith.constant -1.000000e+00 : f32
    %20 = vector.broadcast %cst_9 : f32 to vector<8x128xf32>
    %21 = arith.select %14, %19, %20 : vector<8x128xi1>, vector<8x128xf32>
    %cst_10 = arith.constant 0.000000e+00 : f32
    %22 = vector.broadcast %cst_10 : f32 to vector<8x128xf32>
    %23 = arith.extui %14 : vector<8x128xi1> to vector<8x128xi32>
    %24 = arith.sitofp %23 : vector<8x128xi32> to vector<8x128xf32>
    %cst_11 = arith.constant dense<0.000000e+00> : vector<128xf32>
    %25 = vector.multi_reduction <add>, %24, %cst_11 [0] : vector<8x128xf32> to vector<128xf32>
    %26 = vector.shape_cast %25 : vector<128xf32> to vector<1x128xf32>
    %27 = arith.select %14, %10, %22 : vector<8x128xi1>, vector<8x128xf32>
    %cst_12 = arith.constant dense<0.000000e+00> : vector<128xf32>
    %28 = vector.multi_reduction <add>, %27, %cst_12 [0] : vector<8x128xf32> to vector<128xf32>
    %29 = vector.shape_cast %28 : vector<128xf32> to vector<1x128xf32>
    %cst_13 = arith.constant 0.000000e+00 : f32
    %30 = vector.broadcast %cst_13 : f32 to vector<1x128xf32>
    %cst_14 = arith.constant 0.000000e+00 : f32
    %31 = vector.broadcast %cst_14 : f32 to vector<1x128xf32>
    %cst_15 = arith.constant 1.000000e+00 : f32
    %32 = vector.broadcast %cst_15 : f32 to vector<8x128xf32>
    %33 = arith.cmpf oeq, %21, %32 : vector<8x128xf32>
    %34 = arith.extui %33 : vector<8x128xi1> to vector<8x128xi32>
    %35 = arith.sitofp %34 : vector<8x128xi32> to vector<8x128xf32>
    %cst_16 = arith.constant dense<0.000000e+00> : vector<128xf32>
    %36 = vector.multi_reduction <add>, %35, %cst_16 [0] : vector<8x128xf32> to vector<128xf32>
    %37 = vector.shape_cast %36 : vector<128xf32> to vector<1x128xf32>
    %38 = arith.select %33, %10, %22 : vector<8x128xi1>, vector<8x128xf32>
    %cst_17 = arith.constant dense<0.000000e+00> : vector<128xf32>
    %39 = vector.multi_reduction <add>, %38, %cst_17 [0] : vector<8x128xf32> to vector<128xf32>
    %40 = vector.shape_cast %39 : vector<128xf32> to vector<1x128xf32>
    %41 = arith.addf %30, %37 : vector<1x128xf32>
    %42 = arith.addf %31, %40 : vector<1x128xf32>
    %cst_18 = arith.constant 2.000000e+00 : f32
    %43 = vector.broadcast %cst_18 : f32 to vector<8x128xf32>
    %44 = arith.cmpf oeq, %21, %43 : vector<8x128xf32>
    %45 = arith.extui %44 : vector<8x128xi1> to vector<8x128xi32>
    %46 = arith.sitofp %45 : vector<8x128xi32> to vector<8x128xf32>
    %cst_19 = arith.constant dense<0.000000e+00> : vector<128xf32>
    %47 = vector.multi_reduction <add>, %46, %cst_19 [0] : vector<8x128xf32> to vector<128xf32>
    %48 = vector.shape_cast %47 : vector<128xf32> to vector<1x128xf32>
    %49 = arith.select %44, %10, %22 : vector<8x128xi1>, vector<8x128xf32>
    %cst_20 = arith.constant dense<0.000000e+00> : vector<128xf32>
    %50 = vector.multi_reduction <add>, %49, %cst_20 [0] : vector<8x128xf32> to vector<128xf32>
    %51 = vector.shape_cast %50 : vector<128xf32> to vector<1x128xf32>
    %52 = arith.addf %41, %48 : vector<1x128xf32>
    %53 = arith.addf %42, %51 : vector<1x128xf32>
    %cst_21 = arith.constant 3.000000e+00 : f32
    %54 = vector.broadcast %cst_21 : f32 to vector<8x128xf32>
    %55 = arith.cmpf oeq, %21, %54 : vector<8x128xf32>
    %56 = arith.extui %55 : vector<8x128xi1> to vector<8x128xi32>
    %57 = arith.sitofp %56 : vector<8x128xi32> to vector<8x128xf32>
    %cst_22 = arith.constant dense<0.000000e+00> : vector<128xf32>
    %58 = vector.multi_reduction <add>, %57, %cst_22 [0] : vector<8x128xf32> to vector<128xf32>
    %59 = vector.shape_cast %58 : vector<128xf32> to vector<1x128xf32>
    %60 = arith.select %55, %10, %22 : vector<8x128xi1>, vector<8x128xf32>
    %cst_23 = arith.constant dense<0.000000e+00> : vector<128xf32>
    %61 = vector.multi_reduction <add>, %60, %cst_23 [0] : vector<8x128xf32> to vector<128xf32>
    %62 = vector.shape_cast %61 : vector<128xf32> to vector<1x128xf32>
    %63 = arith.addf %52, %59 : vector<1x128xf32>
    %64 = arith.addf %53, %62 : vector<1x128xf32>
    %cst_24 = arith.constant 4.000000e+00 : f32
    %65 = vector.broadcast %cst_24 : f32 to vector<8x128xf32>
    %66 = arith.cmpf oeq, %21, %65 : vector<8x128xf32>
    %67 = arith.extui %66 : vector<8x128xi1> to vector<8x128xi32>
    %68 = arith.sitofp %67 : vector<8x128xi32> to vector<8x128xf32>
    %cst_25 = arith.constant dense<0.000000e+00> : vector<128xf32>
    %69 = vector.multi_reduction <add>, %68, %cst_25 [0] : vector<8x128xf32> to vector<128xf32>
    %70 = vector.shape_cast %69 : vector<128xf32> to vector<1x128xf32>
    %71 = arith.select %66, %10, %22 : vector<8x128xi1>, vector<8x128xf32>
    %cst_26 = arith.constant dense<0.000000e+00> : vector<128xf32>
    %72 = vector.multi_reduction <add>, %71, %cst_26 [0] : vector<8x128xf32> to vector<128xf32>
    %73 = vector.shape_cast %72 : vector<128xf32> to vector<1x128xf32>
    %74 = arith.addf %63, %70 : vector<1x128xf32>
    %75 = arith.addf %64, %73 : vector<1x128xf32>
    %cst_27 = arith.constant 5.000000e+00 : f32
    %76 = vector.broadcast %cst_27 : f32 to vector<8x128xf32>
    %77 = arith.cmpf oeq, %21, %76 : vector<8x128xf32>
    %78 = arith.extui %77 : vector<8x128xi1> to vector<8x128xi32>
    %79 = arith.sitofp %78 : vector<8x128xi32> to vector<8x128xf32>
    %cst_28 = arith.constant dense<0.000000e+00> : vector<128xf32>
    %80 = vector.multi_reduction <add>, %79, %cst_28 [0] : vector<8x128xf32> to vector<128xf32>
    %81 = vector.shape_cast %80 : vector<128xf32> to vector<1x128xf32>
    %82 = arith.select %77, %10, %22 : vector<8x128xi1>, vector<8x128xf32>
    %cst_29 = arith.constant dense<0.000000e+00> : vector<128xf32>
    %83 = vector.multi_reduction <add>, %82, %cst_29 [0] : vector<8x128xf32> to vector<128xf32>
    %84 = vector.shape_cast %83 : vector<128xf32> to vector<1x128xf32>
    %85 = arith.addf %74, %81 : vector<1x128xf32>
    %86 = arith.addf %75, %84 : vector<1x128xf32>
    %cst_30 = arith.constant 6.000000e+00 : f32
    %87 = vector.broadcast %cst_30 : f32 to vector<8x128xf32>
    %88 = arith.cmpf oeq, %21, %87 : vector<8x128xf32>
    %89 = arith.extui %88 : vector<8x128xi1> to vector<8x128xi32>
    %90 = arith.sitofp %89 : vector<8x128xi32> to vector<8x128xf32>
    %cst_31 = arith.constant dense<0.000000e+00> : vector<128xf32>
    %91 = vector.multi_reduction <add>, %90, %cst_31 [0] : vector<8x128xf32> to vector<128xf32>
    %92 = vector.shape_cast %91 : vector<128xf32> to vector<1x128xf32>
    %93 = arith.select %88, %10, %22 : vector<8x128xi1>, vector<8x128xf32>
    %cst_32 = arith.constant dense<0.000000e+00> : vector<128xf32>
    %94 = vector.multi_reduction <add>, %93, %cst_32 [0] : vector<8x128xf32> to vector<128xf32>
    %95 = vector.shape_cast %94 : vector<128xf32> to vector<1x128xf32>
    %96 = arith.addf %85, %92 : vector<1x128xf32>
    %97 = arith.addf %86, %95 : vector<1x128xf32>
    %cst_33 = arith.constant 7.000000e+00 : f32
    %98 = vector.broadcast %cst_33 : f32 to vector<8x128xf32>
    %99 = arith.cmpf oeq, %21, %98 : vector<8x128xf32>
    %100 = arith.extui %99 : vector<8x128xi1> to vector<8x128xi32>
    %101 = arith.sitofp %100 : vector<8x128xi32> to vector<8x128xf32>
    %cst_34 = arith.constant dense<0.000000e+00> : vector<128xf32>
    %102 = vector.multi_reduction <add>, %101, %cst_34 [0] : vector<8x128xf32> to vector<128xf32>
    %103 = vector.shape_cast %102 : vector<128xf32> to vector<1x128xf32>
    %104 = arith.select %99, %10, %22 : vector<8x128xi1>, vector<8x128xf32>
    %cst_35 = arith.constant dense<0.000000e+00> : vector<128xf32>
    %105 = vector.multi_reduction <add>, %104, %cst_35 [0] : vector<8x128xf32> to vector<128xf32>
    %106 = vector.shape_cast %105 : vector<128xf32> to vector<1x128xf32>
    %107 = arith.addf %96, %103 : vector<1x128xf32>
    %108 = arith.addf %97, %106 : vector<1x128xf32>
    %cst_36 = arith.constant 8.000000e+00 : f32
    %109 = vector.broadcast %cst_36 : f32 to vector<8x128xf32>
    %110 = arith.cmpf oeq, %21, %109 : vector<8x128xf32>
    %111 = arith.extui %110 : vector<8x128xi1> to vector<8x128xi32>
    %112 = arith.sitofp %111 : vector<8x128xi32> to vector<8x128xf32>
    %cst_37 = arith.constant dense<0.000000e+00> : vector<128xf32>
    %113 = vector.multi_reduction <add>, %112, %cst_37 [0] : vector<8x128xf32> to vector<128xf32>
    %114 = vector.shape_cast %113 : vector<128xf32> to vector<1x128xf32>
    %115 = arith.select %110, %10, %22 : vector<8x128xi1>, vector<8x128xf32>
    %cst_38 = arith.constant dense<0.000000e+00> : vector<128xf32>
    %116 = vector.multi_reduction <add>, %115, %cst_38 [0] : vector<8x128xf32> to vector<128xf32>
    %117 = vector.shape_cast %116 : vector<128xf32> to vector<1x128xf32>
    %118 = arith.addf %107, %114 : vector<1x128xf32>
    %119 = arith.addf %108, %117 : vector<1x128xf32>
    %cst_39 = arith.constant 9.000000e+00 : f32
    %120 = vector.broadcast %cst_39 : f32 to vector<8x128xf32>
    %121 = arith.cmpf oeq, %21, %120 : vector<8x128xf32>
    %122 = arith.extui %121 : vector<8x128xi1> to vector<8x128xi32>
    %123 = arith.sitofp %122 : vector<8x128xi32> to vector<8x128xf32>
    %cst_40 = arith.constant dense<0.000000e+00> : vector<128xf32>
    %124 = vector.multi_reduction <add>, %123, %cst_40 [0] : vector<8x128xf32> to vector<128xf32>
    %125 = vector.shape_cast %124 : vector<128xf32> to vector<1x128xf32>
    %126 = arith.select %121, %10, %22 : vector<8x128xi1>, vector<8x128xf32>
    %cst_41 = arith.constant dense<0.000000e+00> : vector<128xf32>
    %127 = vector.multi_reduction <add>, %126, %cst_41 [0] : vector<8x128xf32> to vector<128xf32>
    %128 = vector.shape_cast %127 : vector<128xf32> to vector<1x128xf32>
    %129 = arith.addf %118, %125 : vector<1x128xf32>
    %130 = arith.addf %119, %128 : vector<1x128xf32>
    %131 = arith.subf %26, %129 : vector<1x128xf32>
    %132 = arith.subf %29, %130 : vector<1x128xf32>
    %133 = tpu.concatenate %131, %37, %48, %59, %70, %81, %92, %103, %114, %125, %132, %40, %51, %62, %73, %84 in 0 : vector<1x128xf32>, vector<1x128xf32>, vector<1x128xf32>, vector<1x128xf32>, vector<1x128xf32>, vector<1x128xf32>, vector<1x128xf32>, vector<1x128xf32>, vector<1x128xf32>, vector<1x128xf32>, vector<1x128xf32>, vector<1x128xf32>, vector<1x128xf32>, vector<1x128xf32>, vector<1x128xf32>, vector<1x128xf32> -> vector<16x128xf32>
    %134 = tpu.concatenate %95, %106, %117, %128 in 0 : vector<1x128xf32>, vector<1x128xf32>, vector<1x128xf32>, vector<1x128xf32> -> vector<4x128xf32>
    %135 = tpu.concatenate %133, %134 in 0 : vector<16x128xf32>, vector<4x128xf32> -> vector<20x128xf32>
    %c0_42 = arith.constant 0 : index
    %c0_43 = arith.constant 0 : index
    %c0_44 = arith.constant 0 : index
    %136 = vector.load %arg4[%c0_42, %c0_43, %c0_44] : memref<1x20x128xf32, #tpu.memory_space<vmem>>, vector<1x20x128xf32>
    %137 = vector.shape_cast %136 : vector<1x20x128xf32> to vector<20x128xf32>
    %138 = vector.shape_cast %135 : vector<20x128xf32> to vector<1x20x128xf32>
    tpu.vector_store %arg4[%c0_42, %c0_43, %c0_44], %138 {strides = array<i32>} : memref<1x20x128xf32, #tpu.memory_space<vmem>>, vector<1x20x128xf32>,
    return
  }
  func.func @transform_0(%arg0: i32) -> (i32, i32) {
    %c0_i32 = arith.constant 0 : i32
    %c0_i32_0 = arith.constant 0 : i32
    return %arg0, %c0_i32 : i32, i32
  }
  func.func @transform_1(%arg0: i32) -> (i32, i32) {
    %c0_i32 = arith.constant 0 : i32
    %c0_i32_0 = arith.constant 0 : i32
    return %arg0, %c0_i32 : i32, i32
  }
  func.func @transform_2(%arg0: i32) -> (i32, i32) {
    %c0_i32 = arith.constant 0 : i32
    %c0_i32_0 = arith.constant 0 : i32
    return %arg0, %c0_i32 : i32, i32
  }
  func.func @transform_3(%arg0: i32) -> (i32, i32, i32) {
    %c0_i32 = arith.constant 0 : i32
    %c0_i32_0 = arith.constant 0 : i32
    %c0_i32_1 = arith.constant 0 : i32
    return %arg0, %c0_i32, %c0_i32_0 : i32, i32, i32
  }
}

</mosaic_0001>

<llo_original>
// kernel: tpu_custom_call.1
$region0: #{tpu_custom_call.1}
  #allocation0 [shape = 'u32[]', space=smem, size = 0x4, offset = 0x4, fixed_abs, tag = 'smem constant byte address 0x4 - core index']
  #allocation1 [shape = 'u32[144,128]{1,0:T(1,128)}', space=vmem, size = 0x12000, scoped, tag = 'internal scratch']
  %s0 = inlined_call_operand.hbm [shape: f32[8,128], index: 0, kind: input, shape index: {}]
  %s1 = inlined_call_operand.hbm [shape: f32[8,128], index: 1, kind: input, shape index: {}]
  %s2 = inlined_call_operand.hbm [shape: f32[8,128], index: 2, kind: input, shape index: {}]
  %s3 = inlined_call_operand.vmem [shape: f32[1,20,128], index: 3, kind: output, shape index: {}]
  %s4 = sld [smem:[#allocation0]]
  $region34: #{tpu_custom_call.1} parent=0
    _
  %s6 = ssub.s32 1, %s4
  %s7 = scalar_select 0, %s6, %s4
  $region1: #{tpu_custom_call.1} parent=0
    #allocation2 [shape = 'u8[4096]{0}', space=vmem, size = 0x1000, scoped, tag = 'input window, operand 0, single buffered']
    #allocation3 [shape = 's32[1]{0}', space=sflag, size = 0x4, scoped, tag = 'scoped memory for tpu_custom_call.1']
    #allocation4 [shape = 'u8[4096]{0}', space=vmem, size = 0x1000, scoped, tag = 'input window, operand 1, single buffered']
    #allocation5 [shape = 's32[1]{0}', space=sflag, size = 0x4, scoped, tag = 'scoped memory for tpu_custom_call.1']
    #allocation6 [shape = 'u8[4096]{0}', space=vmem, size = 0x1000, scoped, tag = 'input window, operand 2, single buffered']
    %8 = vsyncpa [#allocation3], 0
    %9 = vsyncpa [#allocation5], 0
    // Predicated region
    $region2: #{tpu_custom_call.1} parent=1 // pred_check
      _
    $region3: #{tpu_custom_call.1} parent=1 // pred_check_branch
      %11 = sbr.rel (0) target = $region5
    $region4: #{tpu_custom_call.1} parent=1 // pred_region
      %s13 = ssub.s32 128, 128
      %14 = vsyncadd [#allocation3], %s13
      %s16 = sshll.u32 [#allocation2], 4
      %s17 = int_to_ptr.vmem [resolvable:$true] %s16
      %19 = dma.hbm_to_vmem [thread:$0]  %s0, 128, %s17, [#allocation3]
    $region5: #{tpu_custom_call.1} parent=1 // pred_fallthru
      _
    // Predicated region
    $region6: #{tpu_custom_call.1} parent=1 // pred_check
      _
    $region7: #{tpu_custom_call.1} parent=1 // pred_check_branch
      %21 = sbr.rel (0) target = $region9
    $region8: #{tpu_custom_call.1} parent=1 // pred_region
      %s23 = ssub.s32 128, 128
      %24 = vsyncadd [#allocation5], %s23
      %s26 = sshll.u32 [#allocation4], 4
      %s27 = int_to_ptr.vmem [resolvable:$true] %s26
      %29 = dma.hbm_to_vmem [thread:$0]  %s1, 128, %s27, [#allocation5]
    $region9: #{tpu_custom_call.1} parent=1 // pred_fallthru
      _
    // Predicated region
    $region10: #{tpu_custom_call.1} parent=1 // pred_check
      _
    $region11: #{tpu_custom_call.1} parent=1 // pred_check_branch
      %31 = sbr.rel (0) target = $region13
    $region12: #{tpu_custom_call.1} parent=1 // pred_region
      %s33 = ssub.s32 128, 128
      %34 = vsyncadd [#allocation5], %s33
      %s36 = sshll.u32 [#allocation6], 4
      %s37 = int_to_ptr.vmem [resolvable:$true] %s36
      %39 = dma.hbm_to_vmem [thread:$0]  %s2, 128, %s37, [#allocation5]
    $region13: #{tpu_custom_call.1} parent=1 // pred_fallthru
      _
    // Predicated region
    $region14: #{tpu_custom_call.1} parent=1 // pred_check
      _
    $region15: #{tpu_custom_call.1} parent=1 // pred_check_branch
      %41 = sbr.rel (0) target = $region17
    $region16: #{tpu_custom_call.1} parent=1 // pred_region
      %42 = dma.done [#allocation3], 128
    $region17: #{tpu_custom_call.1} parent=1 // pred_fallthru
      _
    // Predicated region
    $region18: #{tpu_custom_call.1} parent=1 // pred_check
      _
    $region19: #{tpu_custom_call.1} parent=1 // pred_check_branch
      %44 = sbr.rel (0) target = $region21
    $region20: #{tpu_custom_call.1} parent=1 // pred_region
      %45 = dma.done [#allocation5], 128
    $region21: #{tpu_custom_call.1} parent=1 // pred_fallthru
      _
    // Predicated region
    $region22: #{tpu_custom_call.1} parent=1 // pred_check
      _
    $region23: #{tpu_custom_call.1} parent=1 // pred_check_branch
      %47 = sbr.rel (0) target = $region25
    $region24: #{tpu_custom_call.1} parent=1 // pred_region
      %48 = dma.done [#allocation5], 128
    $region25: #{tpu_custom_call.1} parent=1 // pred_fallthru
      _
    %v49 = vld [vmem:[#allocation2] sm:$0xff]
    %v50 = vld [vmem:[#allocation4] sm:$0xff]
    %v51 = vld [vmem:[#allocation6] sm:$0xff]
    %v52 = vsub.f32 %v49, %v50
    %v53 = vmul.f32 %v52, %v52
    %v54 = vadd.f32 %v53, 0.0004
    %v55 = vrsqrt.pop %v54
    %v56 = vmul.f32 %v54, %v55
    %v57 = vsub.f32 %v56, 0.02
    %v58 = vand.u32 2147483647, %v52
    %v59 = vmul.f32 %v58, %v55
    %vm60 = vcmp.gt.f32.partialorder %v51, 0.0
    %v61 = vmul.f32 %v59, 10.0
    %v62 = vfloor.f32 %v61
    %v63 = vmin.f32 %v62, 9.0
    %v64 = vsel %vm60, %v63, -1.0
    %v65 = vsel %vm60, 1, 0
    %v66 = vcvt.s32.f32 %v65
    %v67 = vrot.slane %v66, 4
    %v68 = vadd.f32 %v66, %v67
    %v69 = vrot.slane %v68, 2
    %v70 = vadd.f32 %v68, %v69
    %v71 = vrot.slane %v70, 1
    %v72 = vadd.f32 %v70, %v71
    %v73 = vsel %vm60, %v57, 0.0
    %v74 = vrot.slane %v73, 4
    %v75 = vadd.f32 %v73, %v74
    %v76 = vrot.slane %v75, 2
    %v77 = vadd.f32 %v75, %v76
    %v78 = vrot.slane %v77, 1
    %v79 = vadd.f32 %v77, %v78
    %vm80 = vcmp.eq.f32.partialorder %v64, 1.0
    %v81 = vsel %vm80, 1, 0
    %v82 = vcvt.s32.f32 %v81
    %v83 = vrot.slane %v82, 4
    %v84 = vadd.f32 %v82, %v83
    %v85 = vrot.slane %v84, 2
    %v86 = vadd.f32 %v84, %v85
    %v87 = vrot.slane %v86, 1
    %v88 = vadd.f32 %v86, %v87
    %v89 = vsel %vm80, %v57, 0.0
    %v90 = vrot.slane %v89, 4
    %v91 = vadd.f32 %v89, %v90
    %v92 = vrot.slane %v91, 2
    %v93 = vadd.f32 %v91, %v92
    %v94 = vrot.slane %v93, 1
    %v95 = vadd.f32 %v93, %v94
    %v96 = vadd.f32 %v88, 0.0
    %v97 = vadd.f32 %v95, 0.0
    %vm98 = vcmp.eq.f32.partialorder %v64, 2.0
    %v99 = vsel %vm98, 1, 0
    %v100 = vcvt.s32.f32 %v99
    %v101 = vrot.slane %v100, 4
    %v102 = vadd.f32 %v100, %v101
    %v103 = vrot.slane %v102, 2
    %v104 = vadd.f32 %v102, %v103
    %v105 = vrot.slane %v104, 1
    %v106 = vadd.f32 %v104, %v105
    %v107 = vsel %vm98, %v57, 0.0
    %v108 = vrot.slane %v107, 4
    %v109 = vadd.f32 %v107, %v108
    %v110 = vrot.slane %v109, 2
    %v111 = vadd.f32 %v109, %v110
    %v112 = vrot.slane %v111, 1
    %v113 = vadd.f32 %v111, %v112
    %v114 = vadd.f32 %v96, %v106
    %v115 = vadd.f32 %v97, %v113
    %vm116 = vcmp.eq.f32.partialorder %v64, 3.0
    %v117 = vsel %vm116, 1, 0
    %v118 = vcvt.s32.f32 %v117
    %v119 = vrot.slane %v118, 4
    %v120 = vadd.f32 %v118, %v119
    %v121 = vrot.slane %v120, 2
    %v122 = vadd.f32 %v120, %v121
    %v123 = vrot.slane %v122, 1
    %v124 = vadd.f32 %v122, %v123
    %v125 = vsel %vm116, %v57, 0.0
    %v126 = vrot.slane %v125, 4
    %v127 = vadd.f32 %v125, %v126
    %v128 = vrot.slane %v127, 2
    %v129 = vadd.f32 %v127, %v128
    %v130 = vrot.slane %v129, 1
    %v131 = vadd.f32 %v129, %v130
    %v132 = vadd.f32 %v114, %v124
    %v133 = vadd.f32 %v115, %v131
    %vm134 = vcmp.eq.f32.partialorder %v64, 4.0
    %v135 = vsel %vm134, 1, 0
    %v136 = vcvt.s32.f32 %v135
    %v137 = vrot.slane %v136, 4
    %v138 = vadd.f32 %v136, %v137
    %v139 = vrot.slane %v138, 2
    %v140 = vadd.f32 %v138, %v139
    %v141 = vrot.slane %v140, 1
    %v142 = vadd.f32 %v140, %v141
    %v143 = vsel %vm134, %v57, 0.0
    %v144 = vrot.slane %v143, 4
    %v145 = vadd.f32 %v143, %v144
    %v146 = vrot.slane %v145, 2
    %v147 = vadd.f32 %v145, %v146
    %v148 = vrot.slane %v147, 1
    %v149 = vadd.f32 %v147, %v148
    %v150 = vadd.f32 %v132, %v142
    %v151 = vadd.f32 %v133, %v149
    %vm152 = vcmp.eq.f32.partialorder %v64, 5.0
    %v153 = vsel %vm152, 1, 0
    %v154 = vcvt.s32.f32 %v153
    %v155 = vrot.slane %v154, 4
    %v156 = vadd.f32 %v154, %v155
    %v157 = vrot.slane %v156, 2
    %v158 = vadd.f32 %v156, %v157
    %v159 = vrot.slane %v158, 1
    %v160 = vadd.f32 %v158, %v159
    %v161 = vsel %vm152, %v57, 0.0
    %v162 = vrot.slane %v161, 4
    %v163 = vadd.f32 %v161, %v162
    %v164 = vrot.slane %v163, 2
    %v165 = vadd.f32 %v163, %v164
    %v166 = vrot.slane %v165, 1
    %v167 = vadd.f32 %v165, %v166
    %v168 = vadd.f32 %v150, %v160
    %v169 = vadd.f32 %v151, %v167
    %vm170 = vcmp.eq.f32.partialorder %v64, 6.0
    %v171 = vsel %vm170, 1, 0
    %v172 = vcvt.s32.f32 %v171
    %v173 = vrot.slane %v172, 4
    %v174 = vadd.f32 %v172, %v173
    %v175 = vrot.slane %v174, 2
    %v176 = vadd.f32 %v174, %v175
    %v177 = vrot.slane %v176, 1
    %v178 = vadd.f32 %v176, %v177
    %v179 = vsel %vm170, %v57, 0.0
    %v180 = vrot.slane %v179, 4
    %v181 = vadd.f32 %v179, %v180
    %v182 = vrot.slane %v181, 2
    %v183 = vadd.f32 %v181, %v182
    %v184 = vrot.slane %v183, 1
    %v185 = vadd.f32 %v183, %v184
    %v186 = vadd.f32 %v168, %v178
    %v187 = vadd.f32 %v169, %v185
    %vm188 = vcmp.eq.f32.partialorder %v64, 7.0
    %v189 = vsel %vm188, 1, 0
    %v190 = vcvt.s32.f32 %v189
    %v191 = vrot.slane %v190, 4
    %v192 = vadd.f32 %v190, %v191
    %v193 = vrot.slane %v192, 2
    %v194 = vadd.f32 %v192, %v193
    %v195 = vrot.slane %v194, 1
    %v196 = vadd.f32 %v194, %v195
    %v197 = vsel %vm188, %v57, 0.0
    %v198 = vrot.slane %v197, 4
    %v199 = vadd.f32 %v197, %v198
    %v200 = vrot.slane %v199, 2
    %v201 = vadd.f32 %v199, %v200
    %v202 = vrot.slane %v201, 1
    %v203 = vadd.f32 %v201, %v202
    %v204 = vadd.f32 %v186, %v196
    %v205 = vadd.f32 %v187, %v203
    %vm206 = vcmp.eq.f32.partialorder %v64, 8.0
    %v207 = vsel %vm206, 1, 0
    %v208 = vcvt.s32.f32 %v207
    %v209 = vrot.slane %v208, 4
    %v210 = vadd.f32 %v208, %v209
    %v211 = vrot.slane %v210, 2
    %v212 = vadd.f32 %v210, %v211
    %v213 = vrot.slane %v212, 1
    %v214 = vadd.f32 %v212, %v213
    %v215 = vsel %vm206, %v57, 0.0
    %v216 = vrot.slane %v215, 4
    %v217 = vadd.f32 %v215, %v216
    %v218 = vrot.slane %v217, 2
    %v219 = vadd.f32 %v217, %v218
    %v220 = vrot.slane %v219, 1
    %v221 = vadd.f32 %v219, %v220
    %v222 = vadd.f32 %v204, %v214
    %v223 = vadd.f32 %v205, %v221
    %vm224 = vcmp.eq.f32.partialorder %v64, 9.0
    %v225 = vsel %vm224, 1, 0
    %v226 = vcvt.s32.f32 %v225
    %v227 = vrot.slane %v226, 4
    %v228 = vadd.f32 %v226, %v227
    %v229 = vrot.slane %v228, 2
    %v230 = vadd.f32 %v228, %v229
    %v231 = vrot.slane %v230, 1
    %v232 = vadd.f32 %v230, %v231
    %v233 = vsel %vm224, %v57, 0.0
    %v234 = vrot.slane %v233, 4
    %v235 = vadd.f32 %v233, %v234
    %v236 = vrot.slane %v235, 2
    %v237 = vadd.f32 %v235, %v236
    %v238 = vrot.slane %v237, 1
    %v239 = vadd.f32 %v237, %v238
    %v240 = vadd.f32 %v222, %v232
    %v241 = vadd.f32 %v223, %v239
    %v242 = vsub.f32 %v72, %v240
    %v243 = vsub.f32 %v79, %v241
    %vm244 = vcmask 1040384
    %v245 = vsel %vm244, %v242, %v88
    %vm246 = vcmask 1041408
    %v247 = vsel %vm246, %v245, %v106
    %vm248 = vcmask 1042432
    %v249 = vsel %vm248, %v247, %v124
    %vm250 = vcmask 1043456
    %v251 = vsel %vm250, %v249, %v142
    %vm252 = vcmask 1044480
    %v253 = vsel %vm252, %v251, %v160
    %vm254 = vcmask 1045504
    %v255 = vsel %vm254, %v253, %v178
    %vm256 = vcmask 1046528
    %v257 = vsel %vm256, %v255, %v196
    %v258 = vsel %vm244, %v214, %v232
    %v259 = vsel %vm246, %v258, %v243
    %v260 = vsel %vm248, %v259, %v95
    %v261 = vsel %vm250, %v260, %v113
    %v262 = vsel %vm252, %v261, %v131
    %v263 = vsel %vm254, %v262, %v149
    %v264 = vsel %vm256, %v263, %v167
    %v265 = vsel %vm244, %v185, %v203
    %v266 = vsel %vm246, %v265, %v221
    %v267 = vsel %vm248, %v266, %v239
    %268 = vst [vmem:[%s3] sm:$0xff] %v257
    %269 = vst [vmem:[%s3 + $0x8] sm:$0xff] %v264
    %270 = vst [vmem:[%s3 + $0x10] sm:$0xf] %v267
    // Predicated region
    $region26: #{tpu_custom_call.1} parent=1 // pred_check
      _
    $region27: #{tpu_custom_call.1} parent=1 // pred_check_branch
      %272 = sbr.rel (0) target = $region29
    $region28: #{tpu_custom_call.1} parent=1 // pred_region
      _
    $region29: #{tpu_custom_call.1} parent=1 // pred_fallthru
      _
    // Predicated region
    $region30: #{tpu_custom_call.1} parent=1 // pred_check
      _
    $region31: #{tpu_custom_call.1} parent=1 // pred_check_branch
      %274 = sbr.rel (0) target = $region33
    $region32: #{tpu_custom_call.1} parent=1 // pred_region
      _
    $region33: #{tpu_custom_call.1} parent=1 // pred_fallthru
      _
    %275 = vsyncpa [#allocation3], 1
    %276 = vsyncpa [#allocation5], 1

</llo_original>
